<compile_context>
chip_gen: v7x
topology: tpu7x:2x2x1
jax: 0.10.0
libtpu: 0.0.40
codegen_flags: <defaults>
</compile_context>

<pallas_src>
import functools

import jax
import jax.numpy as jnp
from jax import lax
from jax.experimental import pallas as pl
from jax.experimental.pallas import tpu as pltpu


def _round_up(a, b):
    return ((a + b - 1) // b) * b


def mfn_kernel(*refs, num_hidden, hidden_width, fused_input):
    if fused_input:
        (x_ref, wc_ref, bc_ref, wh_ref, bh_ref, whd_ref, bhd_ref, y_ref) = refs
    else:
        (x_ref, wf_ref, bf_ref, w1_ref, b1_ref,
         wh_ref, bh_ref, whd_ref, bhd_ref, y_ref) = refs

    H = hidden_width
    x = x_ref[...]

    if fused_input:
        # One pass over the tiny-K input matmul: x @ [Wf | W1] + [bf | b1],
        # sliced on a lane-tile boundary (H % 128 == 0).
        fh = jnp.dot(x, wc_ref[...], preferred_element_type=jnp.float32) + bc_ref[...]
        f = fh[:, :H]
        h = fh[:, H:]
    else:
        f = jnp.dot(x, wf_ref[...], preferred_element_type=jnp.float32) + bf_ref[...]
        h = jnp.dot(x, w1_ref[...], preferred_element_type=jnp.float32) + b1_ref[...]

    u = jnp.sin(f)
    d = jnp.cos(f) - u            # gate: (1 - Z)*U + Z*V == U + Z*(V - U)
    out = jnp.sin(h)

    def layer(l, out):
        lhs = out.astype(wh_ref.dtype)   # bf16 MXU operands iff wh stored bf16
        z = jnp.sin(jnp.dot(lhs, wh_ref[l], preferred_element_type=jnp.float32)
                    + bh_ref[l])
        return u + z * d

    if num_hidden > 0:
        if num_hidden <= 4:
            for l in range(num_hidden):          # small L: static indices
                out = layer(l, out)
        else:
            # Bounded live ranges; unroll=2 keeps LLO scheduler visibility.
            out = lax.fori_loop(0, num_hidden, layer, out, unroll=2)

    y_ref[...] = (jnp.dot(out, whd_ref[...], preferred_element_type=jnp.float32)
                  + bhd_ref[...]).astype(y_ref.dtype)


def modified_fourier_net(x, params, *, tb=256, use_bf16_matmul=False):
    """params: dict with wf, bf, w1, b1, wh (L,H,H), bh (L,1,H), whd, bhd.
    All Linear weights are stored pre-transposed as (in_features, out_features)."""
    wf, bf = params["wf"], params["bf"]
    w1, b1 = params["w1"], params["b1"]
    wh, bh = params["wh"], params["bh"]
    whd, bhd = params["whd"], params["bhd"]

    B, Din = x.shape
    H = int(wf.shape[1])
    L = int(wh.shape[0])
    Dout = int(whd.shape[1])

    # hidden_layers == 1 (L == 0): dummy (never-read) stack so shapes stay
    # non-empty; the in-kernel layer loop runs zero times.
    if L == 0:
        wh = jnp.zeros((1, H, H), wf.dtype)
        bh = jnp.zeros((1, 1, H), wf.dtype)

    if use_bf16_matmul:
        # bf16 operands for the hidden-layer matmuls (f32 accumulation kept).
        # NOTE: relaxes accuracy below 1e-5 vs the f32 reference.
        wh = wh.astype(jnp.bfloat16)

    # Batch tile: multiple of 8 (f32 sublane); capped so the grid has at least
    # two programs whenever the batch allows it (v7x 2-TC megacore split).
    half_b = _round_up(-(-B // 2), 8)
    TB = max(8, min(int(tb), half_b))
    B_pad = _round_up(B, TB)
    x_in = jnp.pad(x, ((0, B_pad - B), (0, 0))) if B_pad != B else x

    # Lane-dense head output (unmasked vst); wrapper slices back to Dout.
    OUTL = max(128, _round_up(Dout, 128))
    whd_p = jnp.pad(whd, ((0, 0), (0, OUTL - Dout))) if OUTL != Dout else whd
    bhd_p = jnp.pad(bhd, ((0, 0), (0, OUTL - Dout))) if OUTL != Dout else bhd

    # Fuse the two tiny-K input matmuls when the split lands on a lane tile.
    fused_input = (H % 128 == 0)
    if fused_input:
        wc = jnp.concatenate([wf, w1], axis=1)   # (Din, 2H)
        bc = jnp.concatenate([bf, b1], axis=1)   # (1, 2H)
        weight_args = (wc, bc, wh, bh, whd_p, bhd_p)
    else:
        weight_args = (wf, bf, w1, b1, wh, bh, whd_p, bhd_p)

    grid = (B_pad // TB,)

    # Whole-array resident VMEM specs: single copy, no per-step DMA, no
    # double-buffering of the weight stack.
    weight_specs = [pl.BlockSpec(memory_space=pltpu.MemorySpace.VMEM)
                    for _ in weight_args]
    x_spec = pl.BlockSpec((TB, Din), lambda i: (i, 0))
    y_spec = pl.BlockSpec((TB, OUTL), lambda i: (i, 0))

    # Explicit VMEM budget: resident weights (single copy) + double-buffered
    # x/y tiles + headroom for live (TB, H) intermediates.
    weight_bytes = sum(int(a.size) * a.dtype.itemsize for a in weight_args)
    tile_bytes = 2 * 4 * TB * (max(Din, 128) + OUTL)
    live_bytes = 12 * 4 * TB * max(H, 128)
    vmem_limit = int(min(max(weight_bytes + tile_bytes + live_bytes + (4 << 20),
                             32 << 20),
                         64 << 20))

    flops = (2 * B_pad * Din * (2 * H)       # fourier + h1 matmuls
             + 2 * B_pad * H * H * L         # hidden layers
             + 2 * B_pad * H * OUTL)         # head
    transcendentals = B_pad * H * (3 + L)    # sin+cos (fourier), sin(h1), sin/layer
    bytes_accessed = int(x_in.size) * 4 + weight_bytes + B_pad * OUTL * 4

    y = pl.pallas_call(
        functools.partial(mfn_kernel, num_hidden=L, hidden_width=H,
                          fused_input=fused_input),
        out_shape=jax.ShapeDtypeStruct((B_pad, OUTL), x.dtype),
        grid_spec=pltpu.PrefetchScalarGridSpec(
            num_scalar_prefetch=0,
            grid=grid,
            in_specs=[x_spec] + weight_specs,
            out_specs=y_spec,
        ),
        compiler_params=pltpu.CompilerParams(
            dimension_semantics=("parallel",),
            vmem_limit_bytes=vmem_limit),
        cost_estimate=pl.CostEstimate(
            flops=flops,
            transcendentals=transcendentals,
            bytes_accessed=bytes_accessed),
    )(x_in, *weight_args)

    return y[:B, :Dout]


def init_params(key, num_inputs, num_outputs, hidden_layers, hidden_width):
    """Deterministic init mimicking nn.Linear: U(-1/sqrt(fan_in), 1/sqrt(fan_in)).
    Weights are stored pre-transposed as (in_features, out_features)."""
    def linear(k, fan_in, fan_out):
        kw, kb = jax.random.split(k)
        bound = 1.0 / jnp.sqrt(fan_in)
        w = jax.random.uniform(kw, (fan_in, fan_out), jnp.float32, -bound, bound)
        b = jax.random.uniform(kb, (1, fan_out), jnp.float32, -bound, bound)
        return w, b

    L = hidden_layers - 1
    keys = jax.random.split(key, 3 + max(L, 1))
    wf, bf = linear(keys[0], num_inputs, hidden_width)
    w1, b1 = linear(keys[1], num_inputs, hidden_width)
    whs, bhs = [], []
    for i in range(L):
        w, b = linear(keys[2 + i], hidden_width, hidden_width)
        whs.append(w)
        bhs.append(b)
    if L > 0:
        wh = jnp.stack(whs, axis=0)                 # (L, H, H)
        bh = jnp.stack(bhs, axis=0)                 # (L, 1, H)
    else:
        wh = jnp.zeros((0, hidden_width, hidden_width), jnp.float32)
        bh = jnp.zeros((0, 1, hidden_width), jnp.float32)
    whd, bhd = linear(keys[-1], hidden_width, num_outputs)
    return dict(wf=wf, bf=bf, w1=w1, b1=b1, wh=wh, bh=bh, whd=whd, bhd=bhd)


def reference_forward(x, p):
    f = x @ p["wf"] + p["bf"]
    u, v = jnp.sin(f), jnp.cos(f)
    out = jnp.sin(x @ p["w1"] + p["b1"])
    for l in range(p["wh"].shape[0]):
        z = jnp.sin(out @ p["wh"][l] + p["bh"][l])
        out = (1.0 - z) * u + z * v
    return out @ p["whd"] + p["bhd"]


if __name__ == "__main__":
    key = jax.random.PRNGKey(0)

    def check(batch, num_inputs, num_outputs, hidden_layers, hidden_width, kseed):
        kx, kp = jax.random.split(jax.random.fold_in(key, kseed))
        x = jax.random.normal(kx, (batch, num_inputs), dtype=jnp.float32)
        p = init_params(kp, num_inputs, num_outputs, hidden_layers, hidden_width)
        y = jax.block_until_ready(modified_fourier_net(x, p))
        y_ref = reference_forward(x, p)
        assert y.shape == (batch, num_outputs)
        assert jnp.allclose(y, y_ref, atol=1e-5, rtol=1e-5), (
            f"mismatch vs reference (layers={hidden_layers}, width={hidden_width})")

    # Split-input path, fully unrolled layer loop (L = 3), single grid step.
    check(batch=8, num_inputs=4, num_outputs=4, hidden_layers=4, hidden_width=32,
          kseed=0)
    # hidden_layers == 1 edge case (no hidden stack).
    check(batch=8, num_inputs=4, num_outputs=4, hidden_layers=1, hidden_width=32,
          kseed=1)
    # Fused input matmul (H % 128 == 0), fori_loop path, padded 2-step batch grid.
    check(batch=24, num_inputs=4, num_outputs=4, hidden_layers=6, hidden_width=128,
          kseed=2)

    print("KERNEL_OK")
</pallas_src>

<mosaic_0001>
module attributes {stable_mosaic.version = 11 : i64} {
  func.func @mfn_kernel(%arg0: i32, %arg1: memref<8x4xf32, #tpu.memory_space<vmem>>, %arg2: memref<4x32xf32, #tpu.memory_space<vmem>>, %arg3: memref<1x32xf32, #tpu.memory_space<vmem>>, %arg4: memref<4x32xf32, #tpu.memory_space<vmem>>, %arg5: memref<1x32xf32, #tpu.memory_space<vmem>>, %arg6: memref<3x32x32xf32, #tpu.memory_space<vmem>>, %arg7: memref<3x1x32xf32, #tpu.memory_space<vmem>>, %arg8: memref<32x128xf32, #tpu.memory_space<vmem>>, %arg9: memref<1x128xf32, #tpu.memory_space<vmem>>, %arg10: memref<8x128xf32, #tpu.memory_space<vmem>>) attributes {dimension_semantics = [#tpu.dimension_semantics<parallel>], iteration_bounds = array<i64: 1>, scalar_prefetch = 0 : i64, scratch_operands = 0 : i64, tpu.core_type = #tpu.core_type<tc>, window_params = [{transform_indices = @transform_0, window_bounds = array<i64: 8, 4>}, {pipeline_mode = #tpu.pipeline_mode<synchronous>, transform_indices = @transform_1, window_bounds = array<i64: 4, 32>}, {pipeline_mode = #tpu.pipeline_mode<synchronous>, transform_indices = @transform_2, window_bounds = array<i64: 1, 32>}, {pipeline_mode = #tpu.pipeline_mode<synchronous>, transform_indices = @transform_3, window_bounds = array<i64: 4, 32>}, {pipeline_mode = #tpu.pipeline_mode<synchronous>, transform_indices = @transform_4, window_bounds = array<i64: 1, 32>}, {pipeline_mode = #tpu.pipeline_mode<synchronous>, transform_indices = @transform_5, window_bounds = array<i64: 3, 32, 32>}, {pipeline_mode = #tpu.pipeline_mode<synchronous>, transform_indices = @transform_6, window_bounds = array<i64: 3, 1, 32>}, {pipeline_mode = #tpu.pipeline_mode<synchronous>, transform_indices = @transform_7, window_bounds = array<i64: 32, 128>}, {pipeline_mode = #tpu.pipeline_mode<synchronous>, transform_indices = @transform_8, window_bounds = array<i64: 1, 128>}, {transform_indices = @transform_9, window_bounds = array<i64: 8, 128>}]} {
    %c0 = arith.constant 0 : index
    %c0_0 = arith.constant 0 : index
    %0 = vector.load %arg1[%c0, %c0_0] : memref<8x4xf32, #tpu.memory_space<vmem>>, vector<8x4xf32>
    %c0_1 = arith.constant 0 : index
    %c0_2 = arith.constant 0 : index
    %1 = vector.load %arg2[%c0_1, %c0_2] : memref<4x32xf32, #tpu.memory_space<vmem>>, vector<4x32xf32>
    %cst = arith.constant dense<0.000000e+00> : vector<8x32xf32>
    %2 = tpu.matmul %0, %1, %cst {dimension_numbers = #tpu.dot_dimension_numbers<[1], [0], [0], [1], [0, 0, 1, 1], [], []>} : vector<8x4xf32>, vector<4x32xf32>, vector<8x32xf32> -> vector<8x32xf32>
    %c0_3 = arith.constant 0 : index
    %c0_4 = arith.constant 0 : index
    %3 = vector.load %arg3[%c0_3, %c0_4] : memref<1x32xf32, #tpu.memory_space<vmem>>, vector<1x32xf32>
    %4 = vector.broadcast %3 : vector<1x32xf32> to vector<8x32xf32>
    %5 = arith.addf %2, %4 : vector<8x32xf32>
    %c0_5 = arith.constant 0 : index
    %c0_6 = arith.constant 0 : index
    %6 = vector.load %arg4[%c0_5, %c0_6] : memref<4x32xf32, #tpu.memory_space<vmem>>, vector<4x32xf32>
    %cst_7 = arith.constant dense<0.000000e+00> : vector<8x32xf32>
    %7 = tpu.matmul %0, %6, %cst_7 {dimension_numbers = #tpu.dot_dimension_numbers<[1], [0], [0], [1], [0, 0, 1, 1], [], []>} : vector<8x4xf32>, vector<4x32xf32>, vector<8x32xf32> -> vector<8x32xf32>
    %c0_8 = arith.constant 0 : index
    %c0_9 = arith.constant 0 : index
    %8 = vector.load %arg5[%c0_8, %c0_9] : memref<1x32xf32, #tpu.memory_space<vmem>>, vector<1x32xf32>
    %9 = vector.broadcast %8 : vector<1x32xf32> to vector<8x32xf32>
    %10 = arith.addf %7, %9 : vector<8x32xf32>
    %11 = math.sin %5 : vector<8x32xf32>
    %12 = math.cos %5 : vector<8x32xf32>
    %13 = arith.subf %12, %11 : vector<8x32xf32>
    %14 = math.sin %10 : vector<8x32xf32>
    %c0_10 = arith.constant 0 : index
    %c0_11 = arith.constant 0 : index
    %c0_12 = arith.constant 0 : index
    %15 = vector.load %arg6[%c0_10, %c0_11, %c0_12] : memref<3x32x32xf32, #tpu.memory_space<vmem>>, vector<1x32x32xf32>
    %16 = vector.shape_cast %15 : vector<1x32x32xf32> to vector<32x32xf32>
    %cst_13 = arith.constant dense<0.000000e+00> : vector<8x32xf32>
    %17 = tpu.matmul %14, %16, %cst_13 {dimension_numbers = #tpu.dot_dimension_numbers<[1], [0], [0], [1], [0, 0, 1, 1], [], []>} : vector<8x32xf32>, vector<32x32xf32>, vector<8x32xf32> -> vector<8x32xf32>
    %c0_14 = arith.constant 0 : index
    %c0_15 = arith.constant 0 : index
    %c0_16 = arith.constant 0 : index
    %18 = vector.load %arg7[%c0_14, %c0_15, %c0_16] : memref<3x1x32xf32, #tpu.memory_space<vmem>>, vector<1x1x32xf32>
    %19 = vector.shape_cast %18 : vector<1x1x32xf32> to vector<1x32xf32>
    %20 = vector.broadcast %19 : vector<1x32xf32> to vector<8x32xf32>
    %21 = arith.addf %17, %20 : vector<8x32xf32>
    %22 = math.sin %21 : vector<8x32xf32>
    %23 = arith.mulf %22, %13 : vector<8x32xf32>
    %24 = arith.addf %11, %23 : vector<8x32xf32>
    %c1 = arith.constant 1 : index
    %c0_17 = arith.constant 0 : index
    %c0_18 = arith.constant 0 : index
    %25 = vector.load %arg6[%c1, %c0_17, %c0_18] : memref<3x32x32xf32, #tpu.memory_space<vmem>>, vector<1x32x32xf32>
    %26 = vector.shape_cast %25 : vector<1x32x32xf32> to vector<32x32xf32>
    %cst_19 = arith.constant dense<0.000000e+00> : vector<8x32xf32>
    %27 = tpu.matmul %24, %26, %cst_19 {dimension_numbers = #tpu.dot_dimension_numbers<[1], [0], [0], [1], [0, 0, 1, 1], [], []>} : vector<8x32xf32>, vector<32x32xf32>, vector<8x32xf32> -> vector<8x32xf32>
    %c1_20 = arith.constant 1 : index
    %c0_21 = arith.constant 0 : index
    %c0_22 = arith.constant 0 : index
    %28 = vector.load %arg7[%c1_20, %c0_21, %c0_22] : memref<3x1x32xf32, #tpu.memory_space<vmem>>, vector<1x1x32xf32>
    %29 = vector.shape_cast %28 : vector<1x1x32xf32> to vector<1x32xf32>
    %30 = vector.broadcast %29 : vector<1x32xf32> to vector<8x32xf32>
    %31 = arith.addf %27, %30 : vector<8x32xf32>
    %32 = math.sin %31 : vector<8x32xf32>
    %33 = arith.mulf %32, %13 : vector<8x32xf32>
    %34 = arith.addf %11, %33 : vector<8x32xf32>
    %c2 = arith.constant 2 : index
    %c0_23 = arith.constant 0 : index
    %c0_24 = arith.constant 0 : index
    %35 = vector.load %arg6[%c2, %c0_23, %c0_24] : memref<3x32x32xf32, #tpu.memory_space<vmem>>, vector<1x32x32xf32>
    %36 = vector.shape_cast %35 : vector<1x32x32xf32> to vector<32x32xf32>
    %cst_25 = arith.constant dense<0.000000e+00> : vector<8x32xf32>
    %37 = tpu.matmul %34, %36, %cst_25 {dimension_numbers = #tpu.dot_dimension_numbers<[1], [0], [0], [1], [0, 0, 1, 1], [], []>} : vector<8x32xf32>, vector<32x32xf32>, vector<8x32xf32> -> vector<8x32xf32>
    %c2_26 = arith.constant 2 : index
    %c0_27 = arith.constant 0 : index
    %c0_28 = arith.constant 0 : index
    %38 = vector.load %arg7[%c2_26, %c0_27, %c0_28] : memref<3x1x32xf32, #tpu.memory_space<vmem>>, vector<1x1x32xf32>
    %39 = vector.shape_cast %38 : vector<1x1x32xf32> to vector<1x32xf32>
    %40 = vector.broadcast %39 : vector<1x32xf32> to vector<8x32xf32>
    %41 = arith.addf %37, %40 : vector<8x32xf32>
    %42 = math.sin %41 : vector<8x32xf32>
    %43 = arith.mulf %42, %13 : vector<8x32xf32>
    %44 = arith.addf %11, %43 : vector<8x32xf32>
    %c0_29 = arith.constant 0 : index
    %c0_30 = arith.constant 0 : index
    %45 = vector.load %arg8[%c0_29, %c0_30] : memref<32x128xf32, #tpu.memory_space<vmem>>, vector<32x128xf32>
    %cst_31 = arith.constant dense<0.000000e+00> : vector<8x128xf32>
    %46 = tpu.matmul %44, %45, %cst_31 {dimension_numbers = #tpu.dot_dimension_numbers<[1], [0], [0], [1], [0, 0, 1, 1], [], []>} : vector<8x32xf32>, vector<32x128xf32>, vector<8x128xf32> -> vector<8x128xf32>
    %c0_32 = arith.constant 0 : index
    %c0_33 = arith.constant 0 : index
    %47 = vector.load %arg9[%c0_32, %c0_33] : memref<1x128xf32, #tpu.memory_space<vmem>>, vector<1x128xf32>
    %48 = vector.broadcast %47 : vector<1x128xf32> to vector<8x128xf32>
    %49 = arith.addf %46, %48 : vector<8x128xf32>
    %c0_34 = arith.constant 0 : index
    %c0_35 = arith.constant 0 : index
    %50 = vector.load %arg10[%c0_34, %c0_35] : memref<8x128xf32, #tpu.memory_space<vmem>>, vector<8x128xf32>
    tpu.vector_store %arg10[%c0_34, %c0_35], %49 {strides = array<i32>} : memref<8x128xf32, #tpu.memory_space<vmem>>, vector<8x128xf32>,
    return
  }
  func.func @transform_0(%arg0: i32) -> (i32, i32) {
    %c0_i32 = arith.constant 0 : i32
    %c0_i32_0 = arith.constant 0 : i32
    return %arg0, %c0_i32 : i32, i32
  }
  func.func @transform_1(%arg0: i32) -> (i32, i32) {
    %c0_i32 = arith.constant 0 : i32
    %c0_i32_0 = arith.constant 0 : i32
    %c0_i32_1 = arith.constant 0 : i32
    return %c0_i32, %c0_i32_0 : i32, i32
  }
  func.func @transform_2(%arg0: i32) -> (i32, i32) {
    %c0_i32 = arith.constant 0 : i32
    %c0_i32_0 = arith.constant 0 : i32
    %c0_i32_1 = arith.constant 0 : i32
    return %c0_i32, %c0_i32_0 : i32, i32
  }
  func.func @transform_3(%arg0: i32) -> (i32, i32) {
    %c0_i32 = arith.constant 0 : i32
    %c0_i32_0 = arith.constant 0 : i32
    %c0_i32_1 = arith.constant 0 : i32
    return %c0_i32, %c0_i32_0 : i32, i32
  }
  func.func @transform_4(%arg0: i32) -> (i32, i32) {
    %c0_i32 = arith.constant 0 : i32
    %c0_i32_0 = arith.constant 0 : i32
    %c0_i32_1 = arith.constant 0 : i32
    return %c0_i32, %c0_i32_0 : i32, i32
  }
  func.func @transform_5(%arg0: i32) -> (i32, i32, i32) {
    %c0_i32 = arith.constant 0 : i32
    %c0_i32_0 = arith.constant 0 : i32
    %c0_i32_1 = arith.constant 0 : i32
    %c0_i32_2 = arith.constant 0 : i32
    return %c0_i32, %c0_i32_0, %c0_i32_1 : i32, i32, i32
  }
  func.func @transform_6(%arg0: i32) -> (i32, i32, i32) {
    %c0_i32 = arith.constant 0 : i32
    %c0_i32_0 = arith.constant 0 : i32
    %c0_i32_1 = arith.constant 0 : i32
    %c0_i32_2 = arith.constant 0 : i32
    return %c0_i32, %c0_i32_0, %c0_i32_1 : i32, i32, i32
  }
  func.func @transform_7(%arg0: i32) -> (i32, i32) {
    %c0_i32 = arith.constant 0 : i32
    %c0_i32_0 = arith.constant 0 : i32
    %c0_i32_1 = arith.constant 0 : i32
    return %c0_i32, %c0_i32_0 : i32, i32
  }
  func.func @transform_8(%arg0: i32) -> (i32, i32) {
    %c0_i32 = arith.constant 0 : i32
    %c0_i32_0 = arith.constant 0 : i32
    %c0_i32_1 = arith.constant 0 : i32
    return %c0_i32, %c0_i32_0 : i32, i32
  }
  func.func @transform_9(%arg0: i32) -> (i32, i32) {
    %c0_i32 = arith.constant 0 : i32
    %c0_i32_0 = arith.constant 0 : i32
    return %arg0, %c0_i32 : i32, i32
  }
}

</mosaic_0001>

<llo_original>
// kernel: tpu_custom_call.1
$region0: #{tpu_custom_call.1}
  #allocation0 [shape = 'u32[]', space=smem, size = 0x4, offset = 0x4, fixed_abs, tag = 'smem constant byte address 0x4 - core index']
  #allocation1 [shape = 'u32[144,128]{1,0:T(1,128)}', space=vmem, size = 0x12000, scoped, tag = 'internal scratch']
  %s0 = inlined_call_operand.vmem [shape: f32[8,4], index: 0, kind: input, shape index: {}]
  %s1 = inlined_call_operand.vmem [shape: f32[4,32], index: 1, kind: input, shape index: {}]
  %s2 = inlined_call_operand.vmem [shape: f32[1,32], index: 2, kind: input, shape index: {}]
  %s3 = inlined_call_operand.hbm [shape: f32[4,32], index: 3, kind: input, shape index: {}]
  %s4 = inlined_call_operand.vmem [shape: f32[1,32], index: 4, kind: input, shape index: {}]
  %s5 = inlined_call_operand.hbm [shape: f32[3,32,32], index: 5, kind: input, shape index: {}]
  %s6 = inlined_call_operand.hbm [shape: f32[3,1,32], index: 6, kind: input, shape index: {}]
  %s7 = inlined_call_operand.vmem [shape: f32[32,128], index: 7, kind: input, shape index: {}]
  %s8 = inlined_call_operand.vmem [shape: f32[1,128], index: 8, kind: input, shape index: {}]
  %s9 = inlined_call_operand.hbm [shape: f32[8,128], index: 9, kind: output, shape index: {}]
  %s10 = sld [smem:[#allocation0]]
  $region58: #{tpu_custom_call.1} parent=0
    _
  %s12 = ssub.s32 1, %s10
  %s13 = scalar_select 0, %s12, %s10
  $region1: #{tpu_custom_call.1} parent=0
    #allocation2 [shape = 'u8[2048]{0}', space=vmem, size = 0x800, scoped, tag = 'input window, operand 3, single buffered']
    #allocation3 [shape = 's32[1]{0}', space=sflag, size = 0x4, scoped, tag = 'scoped memory for tpu_custom_call.1']
    #allocation4 [shape = 's32[1]{0}', space=sflag, size = 0x4, scoped, tag = 'scoped memory for tpu_custom_call.1']
    #allocation5 [shape = 'u8[49152]{0}', space=vmem, size = 0xc000, scoped, tag = 'input window, operand 5, single buffered']
    #allocation6 [shape = 's32[1]{0}', space=sflag, size = 0x4, scoped, tag = 'scoped memory for tpu_custom_call.1']
    #allocation7 [shape = 'u8[1536]{0}', space=vmem, size = 0x800, scoped, tag = 'input window, operand 6, single buffered']
    #allocation8 [shape = 'u8[4096]{0}', space=vmem, size = 0x1000, scoped, tag = 'output window, operand 0, single buffered']
    %14 = vsyncpa [#allocation3], 0
    %15 = vsyncpa [#allocation6], 0
    %16 = vsyncpa [#allocation4], 0
    // Predicated region
    $region2: #{tpu_custom_call.1} parent=1 // pred_check
      _
    $region3: #{tpu_custom_call.1} parent=1 // pred_check_branch
      %18 = sbr.rel (0) target = $region5
    $region4: #{tpu_custom_call.1} parent=1 // pred_region
      _
    $region5: #{tpu_custom_call.1} parent=1 // pred_fallthru
      _
    // Predicated region
    $region6: #{tpu_custom_call.1} parent=1 // pred_check
      _
    $region7: #{tpu_custom_call.1} parent=1 // pred_check_branch
      %20 = sbr.rel (0) target = $region9
    $region8: #{tpu_custom_call.1} parent=1 // pred_region
      _
    $region9: #{tpu_custom_call.1} parent=1 // pred_fallthru
      _
    // Predicated region
    $region10: #{tpu_custom_call.1} parent=1 // pred_check
      _
    $region11: #{tpu_custom_call.1} parent=1 // pred_check_branch
      %22 = sbr.rel (0) target = $region13
    $region12: #{tpu_custom_call.1} parent=1 // pred_region
      _
    $region13: #{tpu_custom_call.1} parent=1 // pred_fallthru
      _
    // Predicated region
    $region14: #{tpu_custom_call.1} parent=1 // pred_check
      _
    $region15: #{tpu_custom_call.1} parent=1 // pred_check_branch
      %24 = sbr.rel (0) target = $region17
    $region16: #{tpu_custom_call.1} parent=1 // pred_region
      %s26 = ssub.s32 64, 64
      %27 = vsyncadd [#allocation3], %s26
      %s29 = sshll.u32 [#allocation2], 4
      %s30 = int_to_ptr.vmem [resolvable:$true] %s29
      %32 = dma.hbm_to_vmem [thread:$0]  %s3, 64, %s30, [#allocation3]
    $region17: #{tpu_custom_call.1} parent=1 // pred_fallthru
      _
    // Predicated region
    $region18: #{tpu_custom_call.1} parent=1 // pred_check
      _
    $region19: #{tpu_custom_call.1} parent=1 // pred_check_branch
      %34 = sbr.rel (0) target = $region21
    $region20: #{tpu_custom_call.1} parent=1 // pred_region
      _
    $region21: #{tpu_custom_call.1} parent=1 // pred_fallthru
      _
    // Predicated region
    $region22: #{tpu_custom_call.1} parent=1 // pred_check
      _
    $region23: #{tpu_custom_call.1} parent=1 // pred_check_branch
      %36 = sbr.rel (0) target = $region25
    $region24: #{tpu_custom_call.1} parent=1 // pred_region
      %s38 = ssub.s32 1536, 1536
      %39 = vsyncadd [#allocation6], %s38
      %s40 = sshll.u32 [#allocation5], 4
      %s41 = int_to_ptr.vmem [resolvable:$true] %s40
      %46 = dma.hbm_to_vmem [thread:$0]  %s5, 1536, %s41, [#allocation6], 128, 128, 8
    $region25: #{tpu_custom_call.1} parent=1 // pred_fallthru
      _
    // Predicated region
    $region26: #{tpu_custom_call.1} parent=1 // pred_check
      _
    $region27: #{tpu_custom_call.1} parent=1 // pred_check_branch
      %48 = sbr.rel (0) target = $region29
    $region28: #{tpu_custom_call.1} parent=1 // pred_region
      %s50 = ssub.s32 48, 48
      %51 = vsyncadd [#allocation6], %s50
      %s52 = sshll.u32 [#allocation7], 4
      %s53 = int_to_ptr.vmem [resolvable:$true] %s52
      %58 = dma.hbm_to_vmem [thread:$0]  %s6, 48, %s53, [#allocation6], 16, 16, 1
    $region29: #{tpu_custom_call.1} parent=1 // pred_fallthru
      _
    // Predicated region
    $region30: #{tpu_custom_call.1} parent=1 // pred_check
      _
    $region31: #{tpu_custom_call.1} parent=1 // pred_check_branch
      %60 = sbr.rel (0) target = $region33
    $region32: #{tpu_custom_call.1} parent=1 // pred_region
      _
    $region33: #{tpu_custom_call.1} parent=1 // pred_fallthru
      _
    // Predicated region
    $region34: #{tpu_custom_call.1} parent=1 // pred_check
      _
    $region35: #{tpu_custom_call.1} parent=1 // pred_check_branch
      %62 = sbr.rel (0) target = $region37
    $region36: #{tpu_custom_call.1} parent=1 // pred_region
      _
    $region37: #{tpu_custom_call.1} parent=1 // pred_fallthru
      _
    // Predicated region
    $region38: #{tpu_custom_call.1} parent=1 // pred_check
      _
    $region39: #{tpu_custom_call.1} parent=1 // pred_check_branch
      %64 = sbr.rel (0) target = $region41
    $region40: #{tpu_custom_call.1} parent=1 // pred_region
      %65 = dma.done [#allocation3], 64
    $region41: #{tpu_custom_call.1} parent=1 // pred_fallthru
      _
    // Predicated region
    $region42: #{tpu_custom_call.1} parent=1 // pred_check
      _
    $region43: #{tpu_custom_call.1} parent=1 // pred_check_branch
      %67 = sbr.rel (0) target = $region45
    $region44: #{tpu_custom_call.1} parent=1 // pred_region
      %68 = dma.done [#allocation6], 1536
    $region45: #{tpu_custom_call.1} parent=1 // pred_fallthru
      _
    // Predicated region
    $region46: #{tpu_custom_call.1} parent=1 // pred_check
      _
    $region47: #{tpu_custom_call.1} parent=1 // pred_check_branch
      %70 = sbr.rel (0) target = $region49
    $region48: #{tpu_custom_call.1} parent=1 // pred_region
      %71 = dma.done [#allocation6], 48
    $region49: #{tpu_custom_call.1} parent=1 // pred_fallthru
      _
    %v72 = vld [vmem:[%s0] sm:$0xff]
    %v73 = vld [vmem:[%s1] sm:$0xf]
    %v74 = vld [vmem:[%s2] sm:$0x1]
    %v76 = vlaneseq
    %v77 = vshrl.u32 %v76, 7
    %v78 = vsub.s32 0, %v77
    %v79 = vrot.slane %v74, %v78
    %vm81 = vcmask 31744
    %v83 = vsel %vm81, %v72, 0
    %vm85 = vcmask 1043456
    %v87 = vsel %vm85, %v73, 0
    %89 = vmatprep.subr.mxu0 0.0
    %90 = vmatpush1.msra.mxu0 %v87
    %91 = vmatprep.subr.mxu0 0.0
    %92 = vmatpush1.msra.mxu0 0.0
    %93 = vmatprep.subr.mxu0 0.0
    %94 = vmatpush1.msra.mxu0 0.0
    %95 = vmatprep.subr.mxu0 0.0
    %96 = vmatpush1.msra.mxu0 0.0
    %97 = vmatprep.subr.mxu0 0.0
    %98 = vmatpush1.msra.mxu0 0.0
    %99 = vmatprep.subr.mxu0 0.0
    %100 = vmatpush1.msra.mxu0 0.0
    %101 = vmatprep.subr.mxu0 0.0
    %102 = vmatpush1.msra.mxu0 0.0
    %103 = vmatprep.subr.mxu0 0.0
    %104 = vmatpush1.msra.mxu0 0.0
    %105 = vmatprep.subr.mxu0 0.0
    %106 = vmatpush1.msra.mxu0 0.0
    %107 = vmatprep.subr.mxu0 0.0
    %108 = vmatpush1.msra.mxu0 0.0
    %109 = vmatprep.subr.mxu0 0.0
    %110 = vmatpush1.msra.mxu0 0.0
    %111 = vmatprep.subr.mxu0 0.0
    %112 = vmatpush1.msra.mxu0 0.0
    %113 = vmatprep.subr.mxu0 0.0
    %114 = vmatpush1.msra.mxu0 0.0
    %115 = vmatprep.subr.mxu0 0.0
    %116 = vmatpush1.msra.mxu0 0.0
    %117 = vmatprep.subr.mxu0 0.0
    %118 = vmatpush1.msra.mxu0 0.0
    %119 = vmatprep.subr.mxu0 0.0
    %120 = vmatpush1.msra.mxu0 0.0
    %121 = vmatprep.subr.mxu0 0.0
    %122 = vmatpush1.msra.mxu0 0.0
    %123 = vmatprep.subr.mxu0 0.0
    %124 = vmatpush1.msra.mxu0 0.0
    %125 = vmatprep.subr.mxu0 0.0
    %126 = vmatpush1.msra.mxu0 0.0
    %127 = vmatprep.subr.mxu0 0.0
    %128 = vmatpush1.msra.mxu0 0.0
    %129 = vmatprep.subr.mxu0 0.0
    %130 = vmatpush1.msra.mxu0 0.0
    %131 = vmatprep.subr.mxu0 0.0
    %132 = vmatpush1.msra.mxu0 0.0
    %133 = vmatprep.subr.mxu0 0.0
    %134 = vmatpush1.msra.mxu0 0.0
    %135 = vmatprep.subr.mxu0 0.0
    %136 = vmatpush1.msra.mxu0 0.0
    %137 = vmatprep.subr.mxu0 0.0
    %138 = vmatpush1.msra.mxu0 0.0
    %139 = vmatprep.subr.mxu0 0.0
    %140 = vmatpush1.msra.mxu0 0.0
    %141 = vmatprep.subr.mxu0 0.0
    %142 = vmatpush1.msra.mxu0 0.0
    %143 = vmatprep.subr.mxu0 0.0
    %144 = vmatpush1.msra.mxu0 0.0
    %145 = vmatprep.subr.mxu0 0.0
    %146 = vmatpush1.msra.mxu0 0.0
    %147 = vmatprep.subr.mxu0 0.0
    %148 = vmatpush1.msra.mxu0 0.0
    %149 = vmatprep.subr.mxu0 0.0
    %150 = vmatpush1.msra.mxu0 0.0
    %151 = vmatprep.subr.mxu0 0.0
    %152 = vmatpush1.msra.mxu0 0.0
    %153 = vmatprep.mubr.f32.mxu0 0.0
    %154 = vmatmul.mubr.f32.gmra.mrb[0].mxu0 %v83
    %v155 = vpop.f32.mrb[0].mxu0
    %v156 = vadd.f32 %v79, %v155
    %v157 = vpop.f32.mrb[0].mxu0
    %158 = vdwg.mxu0
    %v159 = vld [vmem:[#allocation2] sm:$0xf]
    %v160 = vld [vmem:[%s4] sm:$0x1]
    %v162 = vlaneseq
    %v163 = vshrl.u32 %v162, 7
    %v164 = vsub.s32 0, %v163
    %v165 = vrot.slane %v160, %v164
    %v168 = vsel %vm85, %v159, 0
    %170 = vmatprep.subr.mxu0 0.0
    %171 = vmatpush1.msra.mxu0 %v168
    %172 = vmatprep.subr.mxu0 0.0
    %173 = vmatpush1.msra.mxu0 0.0
    %174 = vmatprep.subr.mxu0 0.0
    %175 = vmatpush1.msra.mxu0 0.0
    %176 = vmatprep.subr.mxu0 0.0
    %177 = vmatpush1.msra.mxu0 0.0
    %178 = vmatprep.subr.mxu0 0.0
    %179 = vmatpush1.msra.mxu0 0.0
    %180 = vmatprep.subr.mxu0 0.0
    %181 = vmatpush1.msra.mxu0 0.0
    %182 = vmatprep.subr.mxu0 0.0
    %183 = vmatpush1.msra.mxu0 0.0
    %184 = vmatprep.subr.mxu0 0.0
    %185 = vmatpush1.msra.mxu0 0.0
    %186 = vmatprep.subr.mxu0 0.0
    %187 = vmatpush1.msra.mxu0 0.0
    %188 = vmatprep.subr.mxu0 0.0
    %189 = vmatpush1.msra.mxu0 0.0
    %190 = vmatprep.subr.mxu0 0.0
    %191 = vmatpush1.msra.mxu0 0.0
    %192 = vmatprep.subr.mxu0 0.0
    %193 = vmatpush1.msra.mxu0 0.0
    %194 = vmatprep.subr.mxu0 0.0
    %195 = vmatpush1.msra.mxu0 0.0
    %196 = vmatprep.subr.mxu0 0.0
    %197 = vmatpush1.msra.mxu0 0.0
    %198 = vmatprep.subr.mxu0 0.0
    %199 = vmatpush1.msra.mxu0 0.0
    %200 = vmatprep.subr.mxu0 0.0
    %201 = vmatpush1.msra.mxu0 0.0
    %202 = vmatprep.subr.mxu0 0.0
    %203 = vmatpush1.msra.mxu0 0.0
    %204 = vmatprep.subr.mxu0 0.0
    %205 = vmatpush1.msra.mxu0 0.0
    %206 = vmatprep.subr.mxu0 0.0
    %207 = vmatpush1.msra.mxu0 0.0
    %208 = vmatprep.subr.mxu0 0.0
    %209 = vmatpush1.msra.mxu0 0.0
    %210 = vmatprep.subr.mxu0 0.0
    %211 = vmatpush1.msra.mxu0 0.0
    %212 = vmatprep.subr.mxu0 0.0
    %213 = vmatpush1.msra.mxu0 0.0
    %214 = vmatprep.subr.mxu0 0.0
    %215 = vmatpush1.msra.mxu0 0.0
    %216 = vmatprep.subr.mxu0 0.0
    %217 = vmatpush1.msra.mxu0 0.0
    %218 = vmatprep.subr.mxu0 0.0
    %219 = vmatpush1.msra.mxu0 0.0
    %220 = vmatprep.subr.mxu0 0.0
    %221 = vmatpush1.msra.mxu0 0.0
    %222 = vmatprep.subr.mxu0 0.0
    %223 = vmatpush1.msra.mxu0 0.0
    %224 = vmatprep.subr.mxu0 0.0
    %225 = vmatpush1.msra.mxu0 0.0
    %226 = vmatprep.subr.mxu0 0.0
    %227 = vmatpush1.msra.mxu0 0.0
    %228 = vmatprep.subr.mxu0 0.0
    %229 = vmatpush1.msra.mxu0 0.0
    %230 = vmatprep.subr.mxu0 0.0
    %231 = vmatpush1.msra.mxu0 0.0
    %232 = vmatprep.subr.mxu0 0.0
    %233 = vmatpush1.msra.mxu0 0.0
    %234 = vmatprep.mubr.f32.mxu0 0.0
    %235 = vmatmul.mubr.f32.gmra.mrb[0].mxu0 %v83
    %v236 = vpop.f32.mrb[0].mxu0
    %v237 = vadd.f32 %v165, %v236
    %v238 = vpop.f32.mrb[0].mxu0
    %239 = vdwg.mxu0
    %v240 = vand.u32 2147483647, %v156
    %vm241 = vcmp.le.f32.partialorder %v240, 0.7853982
    %vm242 = vcmp.lt.s32.totalorder %v156, 0
    %v243 = vand.u32 %v156, 2139095040
    %v244 = vshrl.u32 %v243, 23
    %v245 = vsub.s32 %v244, 127
    %v246 = vand.u32 2147483647, %v156
    %v247 = vand.u32 %v246, 8388607
    %v248 = vor.u32 %v247, 8388608
    %v249 = vsub.s32 0, %v248
    %v250 = vadd.s32 %v245, 1
    %vm251 = vcmp.gt.s32.totalorder %v250, 0
    %v252 = vsel %vm251, %v250, 0
    %v253 = vshrl.u32 %v252, 5
    %v254 = vand.u32 %v252, 31
    %v255 = vsub.s32 32, %v254
    %v256 = vshrl.u32 683565275, %v255
    %v257 = vshll.u32 683565275, %v254
    %v258 = vshrl.u32 2475754826, %v255
    %v259 = vor.u32 %v257, %v258
    %v260 = vshll.u32 2475754826, %v254
    %v261 = vshrl.u32 2131351028, %v255
    %v262 = vor.u32 %v260, %v261
    %v263 = vshll.u32 2131351028, %v254
    %v264 = vshrl.u32 2102212464, %v255
    %v265 = vor.u32 %v263, %v264
    %v266 = vshll.u32 2102212464, %v254
    %v267 = vshrl.u32 920167782, %v255
    %v268 = vor.u32 %v266, %v267
    %v269 = vshll.u32 920167782, %v254
    %v270 = vshrl.u32 1326507024, %v255
    %v271 = vor.u32 %v269, %v270
    %vm272 = vcmp.lt.s32.totalorder %v253, 1
    %vm273 = vcmp.lt.s32.totalorder %v253, 2
    %vm274 = vcmp.lt.s32.totalorder %v253, 3
    %vm275 = vcmp.lt.s32.totalorder %v253, 4
    %v276 = vsel %vm272, %v256, %v259
    %v277 = vsel %vm275, %v265, 2102212464
    %v278 = vsel %vm274, %v262, %v277
    %v279 = vsel %vm273, %v276, %v278
    %v280 = vsel %vm272, %v259, %v262
    %v281 = vsel %vm275, %v268, 920167782
    %v282 = vsel %vm274, %v265, %v281
    %v283 = vsel %vm273, %v280, %v282
    %v284 = vsel %vm272, %v262, %v265
    %v285 = vsel %vm275, %v271, 1326507024
    %v286 = vsel %vm274, %v268, %v285
    %v287 = vsel %vm273, %v284, %v286
    %v288 = vshll.u32 %v248, 8
    %v289 = vmul.u32.u64.compose %v288, %v287
    %v290 = vextract.low.u32 %v289
    %v291 = vextract.high.u32 %v289
    %v292 = vmul.u32.u64.compose %v288, %v283
    %v293 = vextract.low.u32 %v292
    %v294 = vextract.high.u32 %v292
    %v295 = vmul.u32 %v288, %v279
    %v296 = vadd.s32 %v291, %v293
    %vm297 = vc.u32 %v291, %v293
    %v298 = vadd.s32 %v294, 1
    %v299 = vsel %vm297, %v298, %v294
    %v300 = vadd.s32 %v295, %v299
    %v301 = vadd.s32 %v300, 536870912
    %v302 = vshrl.u32 %v301, 30
    %v303 = vshll.u32 %v302, 30
    %v304 = vsub.s32 %v300, %v303
    %vm305 = vcmp.lt.s32.totalorder %v304, 0
    %v306 = vsub.s32 0, %v304
    %v307 = vsel %vm305, %v306, %v304
    %v308 = vclz %v307
    %v309 = vsub.s32 %v308, 2
    %vm310 = vcmp.gt.s32.totalorder 0, %v309
    %v311 = vsel %vm310, 0, %v309
    %v312 = vsub.s32 32, %v311
    %v313 = vshll.u32 %v304, %v311
    %v314 = vshrl.u32 %v296, %v312
    %v315 = vor.u32 %v313, %v314
    %v316 = vsub.s32 4294967266, %v311
    %v317 = vadd.s32 %v316, 127
    %v318 = vshll.u32 %v317, 23
    %v319 = vor.u32 4788187, %v318
    %v320 = vand.u32 2147483647, %v319
    %v322 = vcvt.s32.f32 %v315
    %v323 = vmul.f32 %v322, %v320
    %v324 = vxor.u32 %v323, 2147483648
    %v325 = vsel %vm242, %v324, %v323
    %v326 = vsub.s32 4, %v302
    %v327 = vsel %vm242, %v326, %v302
    %v328 = vsel %vm241, %v156, %v325
    %v329 = vsel %vm241, 0, %v327
    %v330 = vcosq.f32.pop %v328
    %v331 = vsinq.f32.pop %v328
    %vm332 = vweird.f32 %v156
    %v333 = vadd.s32 %v329, 3
    %v334 = vand.u32 %v333, 3
    %vm335 = vcmp.lt.s32.totalorder %v334, 2
    %vm336 = vcmp.eq.s32.totalorder %v334, 0
    %v337 = vxor.u32 %v331, 2147483648
    %v338 = vsel %vm336, %v330, %v337
    %vm339 = vcmp.eq.s32.totalorder %v334, 2
    %v340 = vxor.u32 %v330, 2147483648
    %v341 = vsel %vm339, %v340, %v331
    %v342 = vsel %vm335, %v338, %v341
    %v343 = vsel %vm332, nan, %v342
    %v344 = vand.u32 2147483647, %v156
    %vm345 = vcmp.le.f32.partialorder %v344, 0.7853982
    %vm346 = vcmp.lt.s32.totalorder %v156, 0
    %v347 = vand.u32 %v156, 2139095040
    %v348 = vshrl.u32 %v347, 23
    %v349 = vsub.s32 %v348, 127
    %v350 = vand.u32 2147483647, %v156
    %v351 = vand.u32 %v350, 8388607
    %v352 = vor.u32 %v351, 8388608
    %v353 = vsub.s32 0, %v352
    %v354 = vadd.s32 %v349, 1
    %vm355 = vcmp.gt.s32.totalorder %v354, 0
    %v356 = vsel %vm355, %v354, 0
    %v357 = vshrl.u32 %v356, 5
    %v358 = vand.u32 %v356, 31
    %v359 = vsub.s32 32, %v358
    %v360 = vshrl.u32 683565275, %v359
    %v361 = vshll.u32 683565275, %v358
    %v362 = vshrl.u32 2475754826, %v359
    %v363 = vor.u32 %v361, %v362
    %v364 = vshll.u32 2475754826, %v358
    %v365 = vshrl.u32 2131351028, %v359
    %v366 = vor.u32 %v364, %v365
    %v367 = vshll.u32 2131351028, %v358
    %v368 = vshrl.u32 2102212464, %v359
    %v369 = vor.u32 %v367, %v368
    %v370 = vshll.u32 2102212464, %v358
    %v371 = vshrl.u32 920167782, %v359
    %v372 = vor.u32 %v370, %v371
    %v373 = vshll.u32 920167782, %v358
    %v374 = vshrl.u32 1326507024, %v359
    %v375 = vor.u32 %v373, %v374
    %vm376 = vcmp.lt.s32.totalorder %v357, 1
    %vm377 = vcmp.lt.s32.totalorder %v357, 2
    %vm378 = vcmp.lt.s32.totalorder %v357, 3
    %vm379 = vcmp.lt.s32.totalorder %v357, 4
    %v380 = vsel %vm376, %v360, %v363
    %v381 = vsel %vm379, %v369, 2102212464
    %v382 = vsel %vm378, %v366, %v381
    %v383 = vsel %vm377, %v380, %v382
    %v384 = vsel %vm376, %v363, %v366
    %v385 = vsel %vm379, %v372, 920167782
    %v386 = vsel %vm378, %v369, %v385
    %v387 = vsel %vm377, %v384, %v386
    %v388 = vsel %vm376, %v366, %v369
    %v389 = vsel %vm379, %v375, 1326507024
    %v390 = vsel %vm378, %v372, %v389
    %v391 = vsel %vm377, %v388, %v390
    %v392 = vshll.u32 %v352, 8
    %v393 = vmul.u32.u64.compose %v392, %v391
    %v394 = vextract.low.u32 %v393
    %v395 = vextract.high.u32 %v393
    %v396 = vmul.u32.u64.compose %v392, %v387
    %v397 = vextract.low.u32 %v396
    %v398 = vextract.high.u32 %v396
    %v399 = vmul.u32 %v392, %v383
    %v400 = vadd.s32 %v395, %v397
    %vm401 = vc.u32 %v395, %v397
    %v402 = vadd.s32 %v398, 1
    %v403 = vsel %vm401, %v402, %v398
    %v404 = vadd.s32 %v399, %v403
    %v405 = vadd.s32 %v404, 536870912
    %v406 = vshrl.u32 %v405, 30
    %v407 = vshll.u32 %v406, 30
    %v408 = vsub.s32 %v404, %v407
    %vm409 = vcmp.lt.s32.totalorder %v408, 0
    %v410 = vsub.s32 0, %v408
    %v411 = vsel %vm409, %v410, %v408
    %v412 = vclz %v411
    %v413 = vsub.s32 %v412, 2
    %vm414 = vcmp.gt.s32.totalorder 0, %v413
    %v415 = vsel %vm414, 0, %v413
    %v416 = vsub.s32 32, %v415
    %v417 = vshll.u32 %v408, %v415
    %v418 = vshrl.u32 %v400, %v416
    %v419 = vor.u32 %v417, %v418
    %v420 = vsub.s32 4294967266, %v415
    %v421 = vadd.s32 %v420, 127
    %v422 = vshll.u32 %v421, 23
    %v423 = vor.u32 4788187, %v422
    %v424 = vand.u32 2147483647, %v423
    %v426 = vcvt.s32.f32 %v419
    %v427 = vmul.f32 %v426, %v424
    %v428 = vxor.u32 %v427, 2147483648
    %v429 = vsel %vm346, %v428, %v427
    %v430 = vsub.s32 4, %v406
    %v431 = vsel %vm346, %v430, %v406
    %v432 = vsel %vm345, %v156, %v429
    %v433 = vsel %vm345, 0, %v431
    %v434 = vcosq.f32.pop %v432
    %v435 = vsinq.f32.pop %v432
    %vm436 = vweird.f32 %v156
    %v437 = vand.u32 %v433, 3
    %vm438 = vcmp.lt.s32.totalorder %v437, 2
    %vm439 = vcmp.eq.s32.totalorder %v437, 0
    %v440 = vxor.u32 %v435, 2147483648
    %v441 = vsel %vm439, %v434, %v440
    %vm442 = vcmp.eq.s32.totalorder %v437, 2
    %v443 = vxor.u32 %v434, 2147483648
    %v444 = vsel %vm442, %v443, %v435
    %v445 = vsel %vm438, %v441, %v444
    %v446 = vsel %vm436, nan, %v445
    %v447 = vsub.f32 %v446, %v343
    %v448 = vand.u32 2147483647, %v237
    %vm449 = vcmp.le.f32.partialorder %v448, 0.7853982
    %vm450 = vcmp.lt.s32.totalorder %v237, 0
    %v451 = vand.u32 %v237, 2139095040
    %v452 = vshrl.u32 %v451, 23
    %v453 = vsub.s32 %v452, 127
    %v454 = vand.u32 2147483647, %v237
    %v455 = vand.u32 %v454, 8388607
    %v456 = vor.u32 %v455, 8388608
    %v457 = vsub.s32 0, %v456
    %v458 = vadd.s32 %v453, 1
    %vm459 = vcmp.gt.s32.totalorder %v458, 0
    %v460 = vsel %vm459, %v458, 0
    %v461 = vshrl.u32 %v460, 5
    %v462 = vand.u32 %v460, 31
    %v463 = vsub.s32 32, %v462
    %v464 = vshrl.u32 683565275, %v463
    %v465 = vshll.u32 683565275, %v462
    %v466 = vshrl.u32 2475754826, %v463
    %v467 = vor.u32 %v465, %v466
    %v468 = vshll.u32 2475754826, %v462
    %v469 = vshrl.u32 2131351028, %v463
    %v470 = vor.u32 %v468, %v469
    %v471 = vshll.u32 2131351028, %v462
    %v472 = vshrl.u32 2102212464, %v463
    %v473 = vor.u32 %v471, %v472
    %v474 = vshll.u32 2102212464, %v462
    %v475 = vshrl.u32 920167782, %v463
    %v476 = vor.u32 %v474, %v475
    %v477 = vshll.u32 920167782, %v462
    %v478 = vshrl.u32 1326507024, %v463
    %v479 = vor.u32 %v477, %v478
    %vm480 = vcmp.lt.s32.totalorder %v461, 1
    %vm481 = vcmp.lt.s32.totalorder %v461, 2
    %vm482 = vcmp.lt.s32.totalorder %v461, 3
    %vm483 = vcmp.lt.s32.totalorder %v461, 4
    %v484 = vsel %vm480, %v464, %v467
    %v485 = vsel %vm483, %v473, 2102212464
    %v486 = vsel %vm482, %v470, %v485
    %v487 = vsel %vm481, %v484, %v486
    %v488 = vsel %vm480, %v467, %v470
    %v489 = vsel %vm483, %v476, 920167782
    %v490 = vsel %vm482, %v473, %v489
    %v491 = vsel %vm481, %v488, %v490
    %v492 = vsel %vm480, %v470, %v473
    %v493 = vsel %vm483, %v479, 1326507024
    %v494 = vsel %vm482, %v476, %v493
    %v495 = vsel %vm481, %v492, %v494
    %v496 = vshll.u32 %v456, 8
    %v497 = vmul.u32.u64.compose %v496, %v495
    %v498 = vextract.low.u32 %v497
    %v499 = vextract.high.u32 %v497
    %v500 = vmul.u32.u64.compose %v496, %v491
    %v501 = vextract.low.u32 %v500
    %v502 = vextract.high.u32 %v500
    %v503 = vmul.u32 %v496, %v487
    %v504 = vadd.s32 %v499, %v501
    %vm505 = vc.u32 %v499, %v501
    %v506 = vadd.s32 %v502, 1
    %v507 = vsel %vm505, %v506, %v502
    %v508 = vadd.s32 %v503, %v507
    %v509 = vadd.s32 %v508, 536870912
    %v510 = vshrl.u32 %v509, 30
    %v511 = vshll.u32 %v510, 30
    %v512 = vsub.s32 %v508, %v511
    %vm513 = vcmp.lt.s32.totalorder %v512, 0
    %v514 = vsub.s32 0, %v512
    %v515 = vsel %vm513, %v514, %v512
    %v516 = vclz %v515
    %v517 = vsub.s32 %v516, 2
    %vm518 = vcmp.gt.s32.totalorder 0, %v517
    %v519 = vsel %vm518, 0, %v517
    %v520 = vsub.s32 32, %v519
    %v521 = vshll.u32 %v512, %v519
    %v522 = vshrl.u32 %v504, %v520
    %v523 = vor.u32 %v521, %v522
    %v524 = vsub.s32 4294967266, %v519
    %v525 = vadd.s32 %v524, 127
    %v526 = vshll.u32 %v525, 23
    %v527 = vor.u32 4788187, %v526
    %v528 = vand.u32 2147483647, %v527
    %v530 = vcvt.s32.f32 %v523
    %v531 = vmul.f32 %v530, %v528
    %v532 = vxor.u32 %v531, 2147483648
    %v533 = vsel %vm450, %v532, %v531
    %v534 = vsub.s32 4, %v510
    %v535 = vsel %vm450, %v534, %v510
    %v536 = vsel %vm449, %v237, %v533
    %v537 = vsel %vm449, 0, %v535
    %v538 = vcosq.f32.pop %v536
    %v539 = vsinq.f32.pop %v536
    %vm540 = vweird.f32 %v237
    %v541 = vadd.s32 %v537, 3
    %v542 = vand.u32 %v541, 3
    %vm543 = vcmp.lt.s32.totalorder %v542, 2
    %vm544 = vcmp.eq.s32.totalorder %v542, 0
    %v545 = vxor.u32 %v539, 2147483648
    %v546 = vsel %vm544, %v538, %v545
    %vm547 = vcmp.eq.s32.totalorder %v542, 2
    %v548 = vxor.u32 %v538, 2147483648
    %v549 = vsel %vm547, %v548, %v539
    %v550 = vsel %vm543, %v546, %v549
    %v551 = vsel %vm540, nan, %v550
    %v552 = vld [vmem:[#allocation5] sm:$0xff]
    %v553 = vld [vmem:[#allocation5 + $0x8] sm:$0xff]
    %v554 = vld [vmem:[#allocation5 + $0x10] sm:$0xff]
    %v555 = vld [vmem:[#allocation5 + $0x18] sm:$0xff]
    %v556 = vld [vmem:[#allocation7] sm:$0x1]
    %v558 = vlaneseq
    %v559 = vshrl.u32 %v558, 7
    %v560 = vsub.s32 0, %v559
    %v561 = vrot.slane %v556, %v560
    %vm563 = vcmask 261120
    %v565 = vsel %vm563, %v551, 0
    %567 = vmatprep.subr.mxu0 0.0
    %568 = vmatpush1.msra.mxu0 %v552
    %569 = vmatprep.subr.mxu0 0.0
    %570 = vmatpush1.msra.mxu0 %v553
    %571 = vmatprep.subr.mxu0 0.0
    %572 = vmatpush1.msra.mxu0 %v554
    %573 = vmatprep.subr.mxu0 0.0
    %574 = vmatpush1.msra.mxu0 %v555
    %575 = vmatprep.subr.mxu0 0.0
    %576 = vmatpush1.msra.mxu0 0.0
    %577 = vmatprep.subr.mxu0 0.0
    %578 = vmatpush1.msra.mxu0 0.0
    %579 = vmatprep.subr.mxu0 0.0
    %580 = vmatpush1.msra.mxu0 0.0
    %581 = vmatprep.subr.mxu0 0.0
    %582 = vmatpush1.msra.mxu0 0.0
    %583 = vmatprep.subr.mxu0 0.0
    %584 = vmatpush1.msra.mxu0 0.0
    %585 = vmatprep.subr.mxu0 0.0
    %586 = vmatpush1.msra.mxu0 0.0
    %587 = vmatprep.subr.mxu0 0.0
    %588 = vmatpush1.msra.mxu0 0.0
    %589 = vmatprep.subr.mxu0 0.0
    %590 = vmatpush1.msra.mxu0 0.0
    %591 = vmatprep.subr.mxu0 0.0
    %592 = vmatpush1.msra.mxu0 0.0
    %593 = vmatprep.subr.mxu0 0.0
    %594 = vmatpush1.msra.mxu0 0.0
    %595 = vmatprep.subr.mxu0 0.0
    %596 = vmatpush1.msra.mxu0 0.0
    %597 = vmatprep.subr.mxu0 0.0
    %598 = vmatpush1.msra.mxu0 0.0
    %599 = vmatprep.subr.mxu0 0.0
    %600 = vmatpush1.msra.mxu0 0.0
    %601 = vmatprep.subr.mxu0 0.0
    %602 = vmatpush1.msra.mxu0 0.0
    %603 = vmatprep.subr.mxu0 0.0
    %604 = vmatpush1.msra.mxu0 0.0
    %605 = vmatprep.subr.mxu0 0.0
    %606 = vmatpush1.msra.mxu0 0.0
    %607 = vmatprep.subr.mxu0 0.0
    %608 = vmatpush1.msra.mxu0 0.0
    %609 = vmatprep.subr.mxu0 0.0
    %610 = vmatpush1.msra.mxu0 0.0
    %611 = vmatprep.subr.mxu0 0.0
    %612 = vmatpush1.msra.mxu0 0.0
    %613 = vmatprep.subr.mxu0 0.0
    %614 = vmatpush1.msra.mxu0 0.0
    %615 = vmatprep.subr.mxu0 0.0
    %616 = vmatpush1.msra.mxu0 0.0
    %617 = vmatprep.subr.mxu0 0.0
    %618 = vmatpush1.msra.mxu0 0.0
    %619 = vmatprep.subr.mxu0 0.0
    %620 = vmatpush1.msra.mxu0 0.0
    %621 = vmatprep.subr.mxu0 0.0
    %622 = vmatpush1.msra.mxu0 0.0
    %623 = vmatprep.subr.mxu0 0.0
    %624 = vmatpush1.msra.mxu0 0.0
    %625 = vmatprep.subr.mxu0 0.0
    %626 = vmatpush1.msra.mxu0 0.0
    %627 = vmatprep.subr.mxu0 0.0
    %628 = vmatpush1.msra.mxu0 0.0
    %629 = vmatprep.subr.mxu0 0.0
    %630 = vmatpush1.msra.mxu0 0.0
    %631 = vmatprep.mubr.f32.mxu0 0.0
    %632 = vmatmul.mubr.f32.gmra.mrb[0].mxu0 %v565
    %v633 = vpop.f32.mrb[0].mxu0
    %v634 = vadd.f32 %v561, %v633
    %v635 = vpop.f32.mrb[0].mxu0
    %636 = vdwg.mxu0
    %v637 = vand.u32 2147483647, %v634
    %vm638 = vcmp.le.f32.partialorder %v637, 0.7853982
    %vm639 = vcmp.lt.s32.totalorder %v634, 0
    %v640 = vand.u32 %v634, 2139095040
    %v641 = vshrl.u32 %v640, 23
    %v642 = vsub.s32 %v641, 127
    %v643 = vand.u32 2147483647, %v634
    %v644 = vand.u32 %v643, 8388607
    %v645 = vor.u32 %v644, 8388608
    %v646 = vsub.s32 0, %v645
    %v647 = vadd.s32 %v642, 1
    %vm648 = vcmp.gt.s32.totalorder %v647, 0
    %v649 = vsel %vm648, %v647, 0
    %v650 = vshrl.u32 %v649, 5
    %v651 = vand.u32 %v649, 31
    %v652 = vsub.s32 32, %v651
    %v653 = vshrl.u32 683565275, %v652
    %v654 = vshll.u32 683565275, %v651
    %v655 = vshrl.u32 2475754826, %v652
    %v656 = vor.u32 %v654, %v655
    %v657 = vshll.u32 2475754826, %v651
    %v658 = vshrl.u32 2131351028, %v652
    %v659 = vor.u32 %v657, %v658
    %v660 = vshll.u32 2131351028, %v651
    %v661 = vshrl.u32 2102212464, %v652
    %v662 = vor.u32 %v660, %v661
    %v663 = vshll.u32 2102212464, %v651
    %v664 = vshrl.u32 920167782, %v652
    %v665 = vor.u32 %v663, %v664
    %v666 = vshll.u32 920167782, %v651
    %v667 = vshrl.u32 1326507024, %v652
    %v668 = vor.u32 %v666, %v667
    %vm669 = vcmp.lt.s32.totalorder %v650, 1
    %vm670 = vcmp.lt.s32.totalorder %v650, 2
    %vm671 = vcmp.lt.s32.totalorder %v650, 3
    %vm672 = vcmp.lt.s32.totalorder %v650, 4
    %v673 = vsel %vm669, %v653, %v656
    %v674 = vsel %vm672, %v662, 2102212464
    %v675 = vsel %vm671, %v659, %v674
    %v676 = vsel %vm670, %v673, %v675
    %v677 = vsel %vm669, %v656, %v659
    %v678 = vsel %vm672, %v665, 920167782
    %v679 = vsel %vm671, %v662, %v678
    %v680 = vsel %vm670, %v677, %v679
    %v681 = vsel %vm669, %v659, %v662
    %v682 = vsel %vm672, %v668, 1326507024
    %v683 = vsel %vm671, %v665, %v682
    %v684 = vsel %vm670, %v681, %v683
    %v685 = vshll.u32 %v645, 8
    %v686 = vmul.u32.u64.compose %v685, %v684
    %v687 = vextract.low.u32 %v686
    %v688 = vextract.high.u32 %v686
    %v689 = vmul.u32.u64.compose %v685, %v680
    %v690 = vextract.low.u32 %v689
    %v691 = vextract.high.u32 %v689
    %v692 = vmul.u32 %v685, %v676
    %v693 = vadd.s32 %v688, %v690
    %vm694 = vc.u32 %v688, %v690
    %v695 = vadd.s32 %v691, 1
    %v696 = vsel %vm694, %v695, %v691
    %v697 = vadd.s32 %v692, %v696
    %v698 = vadd.s32 %v697, 536870912
    %v699 = vshrl.u32 %v698, 30
    %v700 = vshll.u32 %v699, 30
    %v701 = vsub.s32 %v697, %v700
    %vm702 = vcmp.lt.s32.totalorder %v701, 0
    %v703 = vsub.s32 0, %v701
    %v704 = vsel %vm702, %v703, %v701
    %v705 = vclz %v704
    %v706 = vsub.s32 %v705, 2
    %vm707 = vcmp.gt.s32.totalorder 0, %v706
    %v708 = vsel %vm707, 0, %v706
    %v709 = vsub.s32 32, %v708
    %v710 = vshll.u32 %v701, %v708
    %v711 = vshrl.u32 %v693, %v709
    %v712 = vor.u32 %v710, %v711
    %v713 = vsub.s32 4294967266, %v708
    %v714 = vadd.s32 %v713, 127
    %v715 = vshll.u32 %v714, 23
    %v716 = vor.u32 4788187, %v715
    %v717 = vand.u32 2147483647, %v716
    %v719 = vcvt.s32.f32 %v712
    %v720 = vmul.f32 %v719, %v717
    %v721 = vxor.u32 %v720, 2147483648
    %v722 = vsel %vm639, %v721, %v720
    %v723 = vsub.s32 4, %v699
    %v724 = vsel %vm639, %v723, %v699
    %v725 = vsel %vm638, %v634, %v722
    %v726 = vsel %vm638, 0, %v724
    %v727 = vcosq.f32.pop %v725
    %v728 = vsinq.f32.pop %v725
    %vm729 = vweird.f32 %v634
    %v730 = vadd.s32 %v726, 3
    %v731 = vand.u32 %v730, 3
    %vm732 = vcmp.lt.s32.totalorder %v731, 2
    %vm733 = vcmp.eq.s32.totalorder %v731, 0
    %v734 = vxor.u32 %v728, 2147483648
    %v735 = vsel %vm733, %v727, %v734
    %vm736 = vcmp.eq.s32.totalorder %v731, 2
    %v737 = vxor.u32 %v727, 2147483648
    %v738 = vsel %vm736, %v737, %v728
    %v739 = vsel %vm732, %v735, %v738
    %v740 = vsel %vm729, nan, %v739
    %v741 = vmul.f32 %v740, %v447
    %v742 = vadd.f32 %v343, %v741
    %s743 = scalar_lea.vmem [#allocation5], 32
    %v744 = vld [vmem:[%s743] sm:$0xff]
    %v745 = vld [vmem:[%s743 + $0x8] sm:$0xff]
    %v746 = vld [vmem:[%s743 + $0x10] sm:$0xff]
    %v747 = vld [vmem:[%s743 + $0x18] sm:$0xff]
    %s748 = scalar_lea.vmem [#allocation7], 1
    %v749 = vld [vmem:[%s748] sm:$0x1]
    %v751 = vlaneseq
    %v752 = vshrl.u32 %v751, 7
    %v753 = vsub.s32 0, %v752
    %v754 = vrot.slane %v749, %v753
    %v757 = vsel %vm563, %v742, 0
    %759 = vmatprep.subr.mxu0 0.0
    %760 = vmatpush1.msra.mxu0 %v744
    %761 = vmatprep.subr.mxu0 0.0
    %762 = vmatpush1.msra.mxu0 %v745
    %763 = vmatprep.subr.mxu0 0.0
    %764 = vmatpush1.msra.mxu0 %v746
    %765 = vmatprep.subr.mxu0 0.0
    %766 = vmatpush1.msra.mxu0 %v747
    %767 = vmatprep.subr.mxu0 0.0
    %768 = vmatpush1.msra.mxu0 0.0
    %769 = vmatprep.subr.mxu0 0.0
    %770 = vmatpush1.msra.mxu0 0.0
    %771 = vmatprep.subr.mxu0 0.0
    %772 = vmatpush1.msra.mxu0 0.0
    %773 = vmatprep.subr.mxu0 0.0
    %774 = vmatpush1.msra.mxu0 0.0
    %775 = vmatprep.subr.mxu0 0.0
    %776 = vmatpush1.msra.mxu0 0.0
    %777 = vmatprep.subr.mxu0 0.0
    %778 = vmatpush1.msra.mxu0 0.0
    %779 = vmatprep.subr.mxu0 0.0
    %780 = vmatpush1.msra.mxu0 0.0
    %781 = vmatprep.subr.mxu0 0.0
    %782 = vmatpush1.msra.mxu0 0.0
    %783 = vmatprep.subr.mxu0 0.0
    %784 = vmatpush1.msra.mxu0 0.0
    %785 = vmatprep.subr.mxu0 0.0
    %786 = vmatpush1.msra.mxu0 0.0
    %787 = vmatprep.subr.mxu0 0.0
    %788 = vmatpush1.msra.mxu0 0.0
    %789 = vmatprep.subr.mxu0 0.0
    %790 = vmatpush1.msra.mxu0 0.0
    %791 = vmatprep.subr.mxu0 0.0
    %792 = vmatpush1.msra.mxu0 0.0
    %793 = vmatprep.subr.mxu0 0.0
    %794 = vmatpush1.msra.mxu0 0.0
    %795 = vmatprep.subr.mxu0 0.0
    %796 = vmatpush1.msra.mxu0 0.0
    %797 = vmatprep.subr.mxu0 0.0
    %798 = vmatpush1.msra.mxu0 0.0
    %799 = vmatprep.subr.mxu0 0.0
    %800 = vmatpush1.msra.mxu0 0.0
    %801 = vmatprep.subr.mxu0 0.0
    %802 = vmatpush1.msra.mxu0 0.0
    %803 = vmatprep.subr.mxu0 0.0
    %804 = vmatpush1.msra.mxu0 0.0
    %805 = vmatprep.subr.mxu0 0.0
    %806 = vmatpush1.msra.mxu0 0.0
    %807 = vmatprep.subr.mxu0 0.0
    %808 = vmatpush1.msra.mxu0 0.0
    %809 = vmatprep.subr.mxu0 0.0
    %810 = vmatpush1.msra.mxu0 0.0
    %811 = vmatprep.subr.mxu0 0.0
    %812 = vmatpush1.msra.mxu0 0.0
    %813 = vmatprep.subr.mxu0 0.0
    %814 = vmatpush1.msra.mxu0 0.0
    %815 = vmatprep.subr.mxu0 0.0
    %816 = vmatpush1.msra.mxu0 0.0
    %817 = vmatprep.subr.mxu0 0.0
    %818 = vmatpush1.msra.mxu0 0.0
    %819 = vmatprep.subr.mxu0 0.0
    %820 = vmatpush1.msra.mxu0 0.0
    %821 = vmatprep.subr.mxu0 0.0
    %822 = vmatpush1.msra.mxu0 0.0
    %823 = vmatprep.mubr.f32.mxu0 0.0
    %824 = vmatmul.mubr.f32.gmra.mrb[0].mxu0 %v757
    %v825 = vpop.f32.mrb[0].mxu0
    %v826 = vadd.f32 %v754, %v825
    %v827 = vpop.f32.mrb[0].mxu0
    %828 = vdwg.mxu0
    %v829 = vand.u32 2147483647, %v826
    %vm830 = vcmp.le.f32.partialorder %v829, 0.7853982
    %vm831 = vcmp.lt.s32.totalorder %v826, 0
    %v832 = vand.u32 %v826, 2139095040
    %v833 = vshrl.u32 %v832, 23
    %v834 = vsub.s32 %v833, 127
    %v835 = vand.u32 2147483647, %v826
    %v836 = vand.u32 %v835, 8388607
    %v837 = vor.u32 %v836, 8388608
    %v838 = vsub.s32 0, %v837
    %v839 = vadd.s32 %v834, 1
    %vm840 = vcmp.gt.s32.totalorder %v839, 0
    %v841 = vsel %vm840, %v839, 0
    %v842 = vshrl.u32 %v841, 5
    %v843 = vand.u32 %v841, 31
    %v844 = vsub.s32 32, %v843
    %v845 = vshrl.u32 683565275, %v844
    %v846 = vshll.u32 683565275, %v843
    %v847 = vshrl.u32 2475754826, %v844
    %v848 = vor.u32 %v846, %v847
    %v849 = vshll.u32 2475754826, %v843
    %v850 = vshrl.u32 2131351028, %v844
    %v851 = vor.u32 %v849, %v850
    %v852 = vshll.u32 2131351028, %v843
    %v853 = vshrl.u32 2102212464, %v844
    %v854 = vor.u32 %v852, %v853
    %v855 = vshll.u32 2102212464, %v843
    %v856 = vshrl.u32 920167782, %v844
    %v857 = vor.u32 %v855, %v856
    %v858 = vshll.u32 920167782, %v843
    %v859 = vshrl.u32 1326507024, %v844
    %v860 = vor.u32 %v858, %v859
    %vm861 = vcmp.lt.s32.totalorder %v842, 1
    %vm862 = vcmp.lt.s32.totalorder %v842, 2
    %vm863 = vcmp.lt.s32.totalorder %v842, 3
    %vm864 = vcmp.lt.s32.totalorder %v842, 4
    %v865 = vsel %vm861, %v845, %v848
    %v866 = vsel %vm864, %v854, 2102212464
    %v867 = vsel %vm863, %v851, %v866
    %v868 = vsel %vm862, %v865, %v867
    %v869 = vsel %vm861, %v848, %v851
    %v870 = vsel %vm864, %v857, 920167782
    %v871 = vsel %vm863, %v854, %v870
    %v872 = vsel %vm862, %v869, %v871
    %v873 = vsel %vm861, %v851, %v854
    %v874 = vsel %vm864, %v860, 1326507024
    %v875 = vsel %vm863, %v857, %v874
    %v876 = vsel %vm862, %v873, %v875
    %v877 = vshll.u32 %v837, 8
    %v878 = vmul.u32.u64.compose %v877, %v876
    %v879 = vextract.low.u32 %v878
    %v880 = vextract.high.u32 %v878
    %v881 = vmul.u32.u64.compose %v877, %v872
    %v882 = vextract.low.u32 %v881
    %v883 = vextract.high.u32 %v881
    %v884 = vmul.u32 %v877, %v868
    %v885 = vadd.s32 %v880, %v882
    %vm886 = vc.u32 %v880, %v882
    %v887 = vadd.s32 %v883, 1
    %v888 = vsel %vm886, %v887, %v883
    %v889 = vadd.s32 %v884, %v888
    %v890 = vadd.s32 %v889, 536870912
    %v891 = vshrl.u32 %v890, 30
    %v892 = vshll.u32 %v891, 30
    %v893 = vsub.s32 %v889, %v892
    %vm894 = vcmp.lt.s32.totalorder %v893, 0
    %v895 = vsub.s32 0, %v893
    %v896 = vsel %vm894, %v895, %v893
    %v897 = vclz %v896
    %v898 = vsub.s32 %v897, 2
    %vm899 = vcmp.gt.s32.totalorder 0, %v898
    %v900 = vsel %vm899, 0, %v898
    %v901 = vsub.s32 32, %v900
    %v902 = vshll.u32 %v893, %v900
    %v903 = vshrl.u32 %v885, %v901
    %v904 = vor.u32 %v902, %v903
    %v905 = vsub.s32 4294967266, %v900
    %v906 = vadd.s32 %v905, 127
    %v907 = vshll.u32 %v906, 23
    %v908 = vor.u32 4788187, %v907
    %v909 = vand.u32 2147483647, %v908
    %v911 = vcvt.s32.f32 %v904
    %v912 = vmul.f32 %v911, %v909
    %v913 = vxor.u32 %v912, 2147483648
    %v914 = vsel %vm831, %v913, %v912
    %v915 = vsub.s32 4, %v891
    %v916 = vsel %vm831, %v915, %v891
    %v917 = vsel %vm830, %v826, %v914
    %v918 = vsel %vm830, 0, %v916
    %v919 = vcosq.f32.pop %v917
    %v920 = vsinq.f32.pop %v917
    %vm921 = vweird.f32 %v826
    %v922 = vadd.s32 %v918, 3
    %v923 = vand.u32 %v922, 3
    %vm924 = vcmp.lt.s32.totalorder %v923, 2
    %vm925 = vcmp.eq.s32.totalorder %v923, 0
    %v926 = vxor.u32 %v920, 2147483648
    %v927 = vsel %vm925, %v919, %v926
    %vm928 = vcmp.eq.s32.totalorder %v923, 2
    %v929 = vxor.u32 %v919, 2147483648
    %v930 = vsel %vm928, %v929, %v920
    %v931 = vsel %vm924, %v927, %v930
    %v932 = vsel %vm921, nan, %v931
    %v933 = vmul.f32 %v932, %v447
    %v934 = vadd.f32 %v343, %v933
    %s935 = scalar_lea.vmem [#allocation5], 64
    %v936 = vld [vmem:[%s935] sm:$0xff]
    %v937 = vld [vmem:[%s935 + $0x8] sm:$0xff]
    %v938 = vld [vmem:[%s935 + $0x10] sm:$0xff]
    %v939 = vld [vmem:[%s935 + $0x18] sm:$0xff]
    %s940 = scalar_lea.vmem [#allocation7], 2
    %v941 = vld [vmem:[%s940] sm:$0x1]
    %v943 = vlaneseq
    %v944 = vshrl.u32 %v943, 7
    %v945 = vsub.s32 0, %v944
    %v946 = vrot.slane %v941, %v945
    %v949 = vsel %vm563, %v934, 0
    %951 = vmatprep.subr.mxu0 0.0
    %952 = vmatpush1.msra.mxu0 %v936
    %953 = vmatprep.subr.mxu0 0.0
    %954 = vmatpush1.msra.mxu0 %v937
    %955 = vmatprep.subr.mxu0 0.0
    %956 = vmatpush1.msra.mxu0 %v938
    %957 = vmatprep.subr.mxu0 0.0
    %958 = vmatpush1.msra.mxu0 %v939
    %959 = vmatprep.subr.mxu0 0.0
    %960 = vmatpush1.msra.mxu0 0.0
    %961 = vmatprep.subr.mxu0 0.0
    %962 = vmatpush1.msra.mxu0 0.0
    %963 = vmatprep.subr.mxu0 0.0
    %964 = vmatpush1.msra.mxu0 0.0
    %965 = vmatprep.subr.mxu0 0.0
    %966 = vmatpush1.msra.mxu0 0.0
    %967 = vmatprep.subr.mxu0 0.0
    %968 = vmatpush1.msra.mxu0 0.0
    %969 = vmatprep.subr.mxu0 0.0
    %970 = vmatpush1.msra.mxu0 0.0
    %971 = vmatprep.subr.mxu0 0.0
    %972 = vmatpush1.msra.mxu0 0.0
    %973 = vmatprep.subr.mxu0 0.0
    %974 = vmatpush1.msra.mxu0 0.0
    %975 = vmatprep.subr.mxu0 0.0
    %976 = vmatpush1.msra.mxu0 0.0
    %977 = vmatprep.subr.mxu0 0.0
    %978 = vmatpush1.msra.mxu0 0.0
    %979 = vmatprep.subr.mxu0 0.0
    %980 = vmatpush1.msra.mxu0 0.0
    %981 = vmatprep.subr.mxu0 0.0
    %982 = vmatpush1.msra.mxu0 0.0
    %983 = vmatprep.subr.mxu0 0.0
    %984 = vmatpush1.msra.mxu0 0.0
    %985 = vmatprep.subr.mxu0 0.0
    %986 = vmatpush1.msra.mxu0 0.0
    %987 = vmatprep.subr.mxu0 0.0
    %988 = vmatpush1.msra.mxu0 0.0
    %989 = vmatprep.subr.mxu0 0.0
    %990 = vmatpush1.msra.mxu0 0.0
    %991 = vmatprep.subr.mxu0 0.0
    %992 = vmatpush1.msra.mxu0 0.0
    %993 = vmatprep.subr.mxu0 0.0
    %994 = vmatpush1.msra.mxu0 0.0
    %995 = vmatprep.subr.mxu0 0.0
    %996 = vmatpush1.msra.mxu0 0.0
    %997 = vmatprep.subr.mxu0 0.0
    %998 = vmatpush1.msra.mxu0 0.0
    %999 = vmatprep.subr.mxu0 0.0
    %1000 = vmatpush1.msra.mxu0 0.0
    %1001 = vmatprep.subr.mxu0 0.0
    %1002 = vmatpush1.msra.mxu0 0.0
    %1003 = vmatprep.subr.mxu0 0.0
    %1004 = vmatpush1.msra.mxu0 0.0
    %1005 = vmatprep.subr.mxu0 0.0
    %1006 = vmatpush1.msra.mxu0 0.0
    %1007 = vmatprep.subr.mxu0 0.0
    %1008 = vmatpush1.msra.mxu0 0.0
    %1009 = vmatprep.subr.mxu0 0.0
    %1010 = vmatpush1.msra.mxu0 0.0
    %1011 = vmatprep.subr.mxu0 0.0
    %1012 = vmatpush1.msra.mxu0 0.0
    %1013 = vmatprep.subr.mxu0 0.0
    %1014 = vmatpush1.msra.mxu0 0.0
    %1015 = vmatprep.mubr.f32.mxu0 0.0
    %1016 = vmatmul.mubr.f32.gmra.mrb[0].mxu0 %v949
    %v1017 = vpop.f32.mrb[0].mxu0
    %v1018 = vadd.f32 %v946, %v1017
    %v1019 = vpop.f32.mrb[0].mxu0
    %1020 = vdwg.mxu0
    %v1021 = vand.u32 2147483647, %v1018
    %vm1022 = vcmp.le.f32.partialorder %v1021, 0.7853982
    %vm1023 = vcmp.lt.s32.totalorder %v1018, 0
    %v1024 = vand.u32 %v1018, 2139095040
    %v1025 = vshrl.u32 %v1024, 23
    %v1026 = vsub.s32 %v1025, 127
    %v1027 = vand.u32 2147483647, %v1018
    %v1028 = vand.u32 %v1027, 8388607
    %v1029 = vor.u32 %v1028, 8388608
    %v1030 = vsub.s32 0, %v1029
    %v1031 = vadd.s32 %v1026, 1
    %vm1032 = vcmp.gt.s32.totalorder %v1031, 0
    %v1033 = vsel %vm1032, %v1031, 0
    %v1034 = vshrl.u32 %v1033, 5
    %v1035 = vand.u32 %v1033, 31
    %v1036 = vsub.s32 32, %v1035
    %v1037 = vshrl.u32 683565275, %v1036
    %v1038 = vshll.u32 683565275, %v1035
    %v1039 = vshrl.u32 2475754826, %v1036
    %v1040 = vor.u32 %v1038, %v1039
    %v1041 = vshll.u32 2475754826, %v1035
    %v1042 = vshrl.u32 2131351028, %v1036
    %v1043 = vor.u32 %v1041, %v1042
    %v1044 = vshll.u32 2131351028, %v1035
    %v1045 = vshrl.u32 2102212464, %v1036
    %v1046 = vor.u32 %v1044, %v1045
    %v1047 = vshll.u32 2102212464, %v1035
    %v1048 = vshrl.u32 920167782, %v1036
    %v1049 = vor.u32 %v1047, %v1048
    %v1050 = vshll.u32 920167782, %v1035
    %v1051 = vshrl.u32 1326507024, %v1036
    %v1052 = vor.u32 %v1050, %v1051
    %vm1053 = vcmp.lt.s32.totalorder %v1034, 1
    %vm1054 = vcmp.lt.s32.totalorder %v1034, 2
    %vm1055 = vcmp.lt.s32.totalorder %v1034, 3
    %vm1056 = vcmp.lt.s32.totalorder %v1034, 4
    %v1057 = vsel %vm1053, %v1037, %v1040
    %v1058 = vsel %vm1056, %v1046, 2102212464
    %v1059 = vsel %vm1055, %v1043, %v1058
    %v1060 = vsel %vm1054, %v1057, %v1059
    %v1061 = vsel %vm1053, %v1040, %v1043
    %v1062 = vsel %vm1056, %v1049, 920167782
    %v1063 = vsel %vm1055, %v1046, %v1062
    %v1064 = vsel %vm1054, %v1061, %v1063
    %v1065 = vsel %vm1053, %v1043, %v1046
    %v1066 = vsel %vm1056, %v1052, 1326507024
    %v1067 = vsel %vm1055, %v1049, %v1066
    %v1068 = vsel %vm1054, %v1065, %v1067
    %v1069 = vshll.u32 %v1029, 8
    %v1070 = vmul.u32.u64.compose %v1069, %v1068
    %v1071 = vextract.low.u32 %v1070
    %v1072 = vextract.high.u32 %v1070
    %v1073 = vmul.u32.u64.compose %v1069, %v1064
    %v1074 = vextract.low.u32 %v1073
    %v1075 = vextract.high.u32 %v1073
    %v1076 = vmul.u32 %v1069, %v1060
    %v1077 = vadd.s32 %v1072, %v1074
    %vm1078 = vc.u32 %v1072, %v1074
    %v1079 = vadd.s32 %v1075, 1
    %v1080 = vsel %vm1078, %v1079, %v1075
    %v1081 = vadd.s32 %v1076, %v1080
    %v1082 = vadd.s32 %v1081, 536870912
    %v1083 = vshrl.u32 %v1082, 30
    %v1084 = vshll.u32 %v1083, 30
    %v1085 = vsub.s32 %v1081, %v1084
    %vm1086 = vcmp.lt.s32.totalorder %v1085, 0
    %v1087 = vsub.s32 0, %v1085
    %v1088 = vsel %vm1086, %v1087, %v1085
    %v1089 = vclz %v1088
    %v1090 = vsub.s32 %v1089, 2
    %vm1091 = vcmp.gt.s32.totalorder 0, %v1090
    %v1092 = vsel %vm1091, 0, %v1090
    %v1093 = vsub.s32 32, %v1092
    %v1094 = vshll.u32 %v1085, %v1092
    %v1095 = vshrl.u32 %v1077, %v1093
    %v1096 = vor.u32 %v1094, %v1095
    %v1097 = vsub.s32 4294967266, %v1092
    %v1098 = vadd.s32 %v1097, 127
    %v1099 = vshll.u32 %v1098, 23
    %v1100 = vor.u32 4788187, %v1099
    %v1101 = vand.u32 2147483647, %v1100
    %v1103 = vcvt.s32.f32 %v1096
    %v1104 = vmul.f32 %v1103, %v1101
    %v1105 = vxor.u32 %v1104, 2147483648
    %v1106 = vsel %vm1023, %v1105, %v1104
    %v1107 = vsub.s32 4, %v1083
    %v1108 = vsel %vm1023, %v1107, %v1083
    %v1109 = vsel %vm1022, %v1018, %v1106
    %v1110 = vsel %vm1022, 0, %v1108
    %v1111 = vcosq.f32.pop %v1109
    %v1112 = vsinq.f32.pop %v1109
    %vm1113 = vweird.f32 %v1018
    %v1114 = vadd.s32 %v1110, 3
    %v1115 = vand.u32 %v1114, 3
    %vm1116 = vcmp.lt.s32.totalorder %v1115, 2
    %vm1117 = vcmp.eq.s32.totalorder %v1115, 0
    %v1118 = vxor.u32 %v1112, 2147483648
    %v1119 = vsel %vm1117, %v1111, %v1118
    %vm1120 = vcmp.eq.s32.totalorder %v1115, 2
    %v1121 = vxor.u32 %v1111, 2147483648
    %v1122 = vsel %vm1120, %v1121, %v1112
    %v1123 = vsel %vm1116, %v1119, %v1122
    %v1124 = vsel %vm1113, nan, %v1123
    %v1125 = vmul.f32 %v1124, %v447
    %v1126 = vadd.f32 %v343, %v1125
    %v1127 = vld [vmem:[%s7] sm:$0xff]
    %v1128 = vld [vmem:[%s7 + $0x8] sm:$0xff]
    %v1129 = vld [vmem:[%s7 + $0x10] sm:$0xff]
    %v1130 = vld [vmem:[%s7 + $0x18] sm:$0xff]
    %v1131 = vld [vmem:[%s8] sm:$0x1]
    %v1133 = vlaneseq
    %v1134 = vshrl.u32 %v1133, 7
    %v1135 = vsub.s32 0, %v1134
    %v1136 = vrot.slane %v1131, %v1135
    %v1139 = vsel %vm563, %v1126, 0
    %1141 = vmatprep.subr.mxu0 0.0
    %1142 = vmatpush1.msra.mxu0 %v1127
    %1143 = vmatprep.subr.mxu0 0.0
    %1144 = vmatpush1.msra.mxu0 %v1128
    %1145 = vmatprep.subr.mxu0 0.0
    %1146 = vmatpush1.msra.mxu0 %v1129
    %1147 = vmatprep.subr.mxu0 0.0
    %1148 = vmatpush1.msra.mxu0 %v1130
    %1149 = vmatprep.subr.mxu0 0.0
    %1150 = vmatpush1.msra.mxu0 0.0
    %1151 = vmatprep.subr.mxu0 0.0
    %1152 = vmatpush1.msra.mxu0 0.0
    %1153 = vmatprep.subr.mxu0 0.0
    %1154 = vmatpush1.msra.mxu0 0.0
    %1155 = vmatprep.subr.mxu0 0.0
    %1156 = vmatpush1.msra.mxu0 0.0
    %1157 = vmatprep.subr.mxu0 0.0
    %1158 = vmatpush1.msra.mxu0 0.0
    %1159 = vmatprep.subr.mxu0 0.0
    %1160 = vmatpush1.msra.mxu0 0.0
    %1161 = vmatprep.subr.mxu0 0.0
    %1162 = vmatpush1.msra.mxu0 0.0
    %1163 = vmatprep.subr.mxu0 0.0
    %1164 = vmatpush1.msra.mxu0 0.0
    %1165 = vmatprep.subr.mxu0 0.0
    %1166 = vmatpush1.msra.mxu0 0.0
    %1167 = vmatprep.subr.mxu0 0.0
    %1168 = vmatpush1.msra.mxu0 0.0
    %1169 = vmatprep.subr.mxu0 0.0
    %1170 = vmatpush1.msra.mxu0 0.0
    %1171 = vmatprep.subr.mxu0 0.0
    %1172 = vmatpush1.msra.mxu0 0.0
    %1173 = vmatprep.subr.mxu0 0.0
    %1174 = vmatpush1.msra.mxu0 0.0
    %1175 = vmatprep.subr.mxu0 0.0
    %1176 = vmatpush1.msra.mxu0 0.0
    %1177 = vmatprep.subr.mxu0 0.0
    %1178 = vmatpush1.msra.mxu0 0.0
    %1179 = vmatprep.subr.mxu0 0.0
    %1180 = vmatpush1.msra.mxu0 0.0
    %1181 = vmatprep.subr.mxu0 0.0
    %1182 = vmatpush1.msra.mxu0 0.0
    %1183 = vmatprep.subr.mxu0 0.0
    %1184 = vmatpush1.msra.mxu0 0.0
    %1185 = vmatprep.subr.mxu0 0.0
    %1186 = vmatpush1.msra.mxu0 0.0
    %1187 = vmatprep.subr.mxu0 0.0
    %1188 = vmatpush1.msra.mxu0 0.0
    %1189 = vmatprep.subr.mxu0 0.0
    %1190 = vmatpush1.msra.mxu0 0.0
    %1191 = vmatprep.subr.mxu0 0.0
    %1192 = vmatpush1.msra.mxu0 0.0
    %1193 = vmatprep.subr.mxu0 0.0
    %1194 = vmatpush1.msra.mxu0 0.0
    %1195 = vmatprep.subr.mxu0 0.0
    %1196 = vmatpush1.msra.mxu0 0.0
    %1197 = vmatprep.subr.mxu0 0.0
    %1198 = vmatpush1.msra.mxu0 0.0
    %1199 = vmatprep.subr.mxu0 0.0
    %1200 = vmatpush1.msra.mxu0 0.0
    %1201 = vmatprep.subr.mxu0 0.0
    %1202 = vmatpush1.msra.mxu0 0.0
    %1203 = vmatprep.subr.mxu0 0.0
    %1204 = vmatpush1.msra.mxu0 0.0
    %1205 = vmatprep.mubr.f32.mxu0 0.0
    %1206 = vmatmul.mubr.f32.gmra.mrb[0].mxu0 %v1139
    %v1207 = vpop.f32.mrb[0].mxu0
    %v1208 = vadd.f32 %v1136, %v1207
    %v1209 = vpop.f32.mrb[0].mxu0
    %1210 = vdwg.mxu0
    %1211 = vst [vmem:[#allocation8] sm:$0xff] %v1208
    // Predicated region
    $region50: #{tpu_custom_call.1} parent=1 // pred_check
      _
    $region51: #{tpu_custom_call.1} parent=1 // pred_check_branch
      %1213 = sbr.rel (0) target = $region53
    $region52: #{tpu_custom_call.1} parent=1 // pred_region
      %s1215 = ssub.s32 128, 128
      %1216 = vsyncadd [#allocation4], %s1215
      %s1218 = sshll.u32 [#allocation8], 4
      %s1219 = int_to_ptr.vmem [resolvable:$true] %s1218
      %1221 = dma.vmem_to_hbm [thread:$0]  %s1219, 128, %s9, [#allocation4]
    $region53: #{tpu_custom_call.1} parent=1 // pred_fallthru
      _
    // Predicated region
    $region54: #{tpu_custom_call.1} parent=1 // pred_check
      _
    $region55: #{tpu_custom_call.1} parent=1 // pred_check_branch
      %1223 = sbr.rel (0) target = $region57
    $region56: #{tpu_custom_call.1} parent=1 // pred_region
      %1224 = dma.done [#allocation4], 128
    $region57: #{tpu_custom_call.1} parent=1 // pred_fallthru
      _
    %1225 = vsyncpa [#allocation3], 1
    %1226 = vsyncpa [#allocation6], 1
    %1227 = vsyncpa [#allocation4], 1

</llo_original>
